<compile_context>
chip_gen: v5e
topology: v5e:2x2
jax: 0.10.0
libtpu: 0.0.40
codegen_flags: <defaults>
</compile_context>

<pallas_src>
from functools import partial
from typing import List

import jax
import jax.numpy as jnp
from jax.experimental import pallas as pl
from jax.experimental.pallas import tpu as pltpu

HIDDEN = 32
LANE = 128                   # fused-head output width padded to a multiple of this
BATCH_TILE = 4096            # max rows per grid step (multiple of 8)
VMEM_TILE_BUDGET = 8 << 20   # bytes for double-buffered x/out tiles (v7x-safe)


def _round_up(x: int, m: int) -> int:
    return ((x + m - 1) // m) * m


# ----------------------------- Pallas kernel ------------------------------ #
def _policy_kernel(x_ref, w_enc_ref, b_enc_ref, w_head_ref, b_head_ref, out_ref):
    # encoder: Linear(obs, 32) + ReLU   (MXU matmul + VPU elementwise)
    h = jnp.dot(x_ref[...], w_enc_ref[...], preferred_element_type=jnp.float32)
    h = jnp.maximum(h + b_enc_ref[...], 0.0)
    # all discrete heads fused: Linear(32, TOTAL_PAD) -> lane-dense store
    out_ref[...] = (
        jnp.dot(h, w_head_ref[...], preferred_element_type=jnp.float32)
        + b_head_ref[...]
    )


# ------------------------- parameter pre-packing -------------------------- #
def pack_params(w_enc, b_enc, head_ws, head_bs):
    """Pack per-head weights once (init time), padding output width to 128 lanes."""
    sizes = tuple(int(w.shape[1]) for w in head_ws)
    total = sum(sizes)
    total_pad = max(LANE, _round_up(total, LANE))
    hidden = w_enc.shape[1]

    w_head = jnp.concatenate(head_ws, axis=1)                       # [32, total]
    b_head = jnp.concatenate(head_bs, axis=0)                       # [total]
    # zero-pad the fused head so padded lanes produce exactly 0 (ignored by consumer)
    w_head_p = jnp.zeros((hidden, total_pad), jnp.float32).at[:, :total].set(w_head)
    b_head_p = jnp.zeros((1, total_pad), jnp.float32).at[:, :total].set(b_head)

    params = {
        "w_enc": w_enc.astype(jnp.float32),                         # [obs, 32]
        "b_enc": b_enc.reshape(1, hidden).astype(jnp.float32),      # [1, 32]
        "w_head": w_head_p,                                         # [32, total_pad]
        "b_head": b_head_p,                                         # [1, total_pad]
    }
    return params, sizes


# ---------------------------- tile selection ------------------------------ #
def _choose_tile(B: int, obs: int, total_pad: int, batch_tile: int) -> int:
    """Pick a batch tile (static, from shapes).

    - B <= 8: single full-array block (block rows equal the array dim).
    - else:  at least 2 grid steps (v7x megacore uses both TensorCores and
             each core keeps double-buffering overlap), capped by BATCH_TILE
             and a VMEM budget derived from (obs + total_pad) so wider action
             spaces stay inside scoped VMEM on every generation.
    """
    if B <= 8:
        return B
    tb = _round_up(pl.cdiv(B, 2), 8)          # guarantees >= 2 grid steps
    row_bytes = 8 * (obs + total_pad)         # 2 buffers x f32 x (in + out) per row
    tb_cap = max(8, (VMEM_TILE_BUDGET // row_bytes) // 8 * 8)
    return max(8, min(tb, tb_cap, batch_tile))


# --------------------------- jit'd slab forward ---------------------------- #
@partial(jax.jit, static_argnames=("batch_tile",))
def _forward_slab(x: jax.Array, params: dict, batch_tile: int = BATCH_TILE) -> jax.Array:
    """Returns the fused, lane-padded logits slab [B, total_pad] (f32)."""
    B, obs = x.shape
    hidden = params["w_enc"].shape[1]
    total_pad = params["w_head"].shape[1]

    tb = _choose_tile(B, obs, total_pad, batch_tile)
    grid = (pl.cdiv(B, tb),)                  # ragged last block: reads clamped,
                                              # writes masked by Pallas — no x copy

    return pl.pallas_call(
        _policy_kernel,
        out_shape=jax.ShapeDtypeStruct((B, total_pad), jnp.float32),
        grid=grid,
        in_specs=[
            pl.BlockSpec((tb, obs), lambda i: (i, 0)),              # x: batch-tiled
            pl.BlockSpec((obs, hidden), lambda i: (0, 0)),          # w_enc: resident
            pl.BlockSpec((1, hidden), lambda i: (0, 0)),            # b_enc: resident
            pl.BlockSpec((hidden, total_pad), lambda i: (0, 0)),    # w_head: resident
            pl.BlockSpec((1, total_pad), lambda i: (0, 0)),         # b_head: resident
        ],
        out_specs=pl.BlockSpec((tb, total_pad), lambda i: (i, 0)),  # lane-dense output
        compiler_params=pltpu.CompilerParams(
            dimension_semantics=("parallel",),                      # v7x: 2 TCs split batch
        ),
    )(x, params["w_enc"], params["b_enc"], params["w_head"], params["b_head"])


# ------------------------------- forward ---------------------------------- #
def multi_discrete_policy_forward(
    x: jax.Array,
    params: dict,
    sizes: tuple,
    batch_tile: int = BATCH_TILE,
) -> List[jax.Array]:
    """Forward pass matching MultiDiscretePolicyNetwork.forward.

    The jit'd kernel returns one contiguous padded slab; the per-head split is
    done lazily here (outside the jit) so no narrow arrays are materialized on
    the critical path.
    """
    slab = _forward_slab(x, params, batch_tile=batch_tile)   # [B, total_pad]
    out, off = [], 0
    for s in sizes:
        out.append(slab[:, off:off + s])
        off += s
    return out


# ------------------------ deterministic param init ------------------------ #
def init_params(key, obs_shape: int, action_shape: List[int]):
    """Deterministic init mimicking nn.Linear's U(-1/sqrt(fan_in), 1/sqrt(fan_in))."""
    hidden = HIDDEN
    keys = jax.random.split(key, 2 + 2 * len(action_shape))
    lim_e = 1.0 / (obs_shape ** 0.5)
    w_enc = jax.random.uniform(keys[0], (obs_shape, hidden), jnp.float32, -lim_e, lim_e)
    b_enc = jax.random.uniform(keys[1], (hidden,), jnp.float32, -lim_e, lim_e)
    lim_h = 1.0 / (hidden ** 0.5)
    head_ws, head_bs = [], []
    for i, size in enumerate(action_shape):
        head_ws.append(
            jax.random.uniform(keys[2 + 2 * i], (hidden, size), jnp.float32, -lim_h, lim_h)
        )
        head_bs.append(
            jax.random.uniform(keys[3 + 2 * i], (size,), jnp.float32, -lim_h, lim_h)
        )
    return w_enc, b_enc, head_ws, head_bs


# ------------------------------ reference -------------------------------- #
def reference_forward(x, w_enc, b_enc, head_ws, head_bs):
    h = jnp.maximum(x @ w_enc + b_enc, 0.0)
    return [h @ w + b for w, b in zip(head_ws, head_bs)]


if __name__ == "__main__":
    obs_shape = 16
    action_shape = [6, 4, 5]

    key = jax.random.PRNGKey(0)
    k_x, k_p, k_x2 = jax.random.split(key, 3)
    w_enc, b_enc, head_ws, head_bs = init_params(k_p, obs_shape, action_shape)
    params, sizes = pack_params(w_enc, b_enc, head_ws, head_bs)

    # Small batch (matches the PyTorch tutorial usage); single full-array block.
    B = 2
    x = jax.random.normal(k_x, (B, obs_shape), jnp.float32)
    logits = multi_discrete_policy_forward(x, params, sizes)
    logits = [jax.block_until_ready(l) for l in logits]
    ref = reference_forward(x, w_enc, b_enc, head_ws, head_bs)
    for got, want, size in zip(logits, ref, action_shape):
        assert got.shape == (B, size), got.shape
        assert jnp.allclose(got, want, atol=1e-5, rtol=1e-5), "mismatch vs reference (B=2)"

    # Larger, non-tile-divisible batch: exercises the 2-step "parallel" grid
    # and Pallas's ragged last-block masking (no explicit x padding copy).
    B2 = 1000
    x2 = jax.random.normal(k_x2, (B2, obs_shape), jnp.float32)
    logits2 = multi_discrete_policy_forward(x2, params, sizes)
    logits2 = [jax.block_until_ready(l) for l in logits2]
    ref2 = reference_forward(x2, w_enc, b_enc, head_ws, head_bs)
    for got, want, size in zip(logits2, ref2, action_shape):
        assert got.shape == (B2, size), got.shape
        assert jnp.allclose(got, want, atol=1e-4, rtol=1e-4), "mismatch vs reference (B=1000)"

    print("KERNEL_OK")
</pallas_src>

<mosaic_0001>
module attributes {stable_mosaic.version = 11 : i64} {
  func.func @_policy_kernel(%arg0: i32, %arg1: memref<2x16xf32, #tpu.memory_space<vmem>>, %arg2: memref<16x32xf32, #tpu.memory_space<vmem>>, %arg3: memref<1x32xf32, #tpu.memory_space<vmem>>, %arg4: memref<32x128xf32, #tpu.memory_space<vmem>>, %arg5: memref<1x128xf32, #tpu.memory_space<vmem>>, %arg6: memref<2x128xf32, #tpu.memory_space<vmem>>) attributes {dimension_semantics = [#tpu.dimension_semantics<parallel>], iteration_bounds = array<i64: 1>, scalar_prefetch = 0 : i64, scratch_operands = 0 : i64, tpu.core_type = #tpu.core_type<tc>, window_params = [{transform_indices = @transform_0, window_bounds = array<i64: 2, 16>}, {pipeline_mode = #tpu.pipeline_mode<synchronous>, transform_indices = @transform_1, window_bounds = array<i64: 16, 32>}, {pipeline_mode = #tpu.pipeline_mode<synchronous>, transform_indices = @transform_2, window_bounds = array<i64: 1, 32>}, {pipeline_mode = #tpu.pipeline_mode<synchronous>, transform_indices = @transform_3, window_bounds = array<i64: 32, 128>}, {pipeline_mode = #tpu.pipeline_mode<synchronous>, transform_indices = @transform_4, window_bounds = array<i64: 1, 128>}, {transform_indices = @transform_5, window_bounds = array<i64: 2, 128>}]} {
    %c0 = arith.constant 0 : index
    %c0_0 = arith.constant 0 : index
    %0 = vector.load %arg1[%c0, %c0_0] : memref<2x16xf32, #tpu.memory_space<vmem>>, vector<2x16xf32>
    %c0_1 = arith.constant 0 : index
    %c0_2 = arith.constant 0 : index
    %1 = vector.load %arg2[%c0_1, %c0_2] : memref<16x32xf32, #tpu.memory_space<vmem>>, vector<16x32xf32>
    %cst = arith.constant dense<0.000000e+00> : vector<2x32xf32>
    %2 = tpu.matmul %0, %1, %cst {dimension_numbers = #tpu.dot_dimension_numbers<[1], [0], [0], [1], [0, 0, 1, 1], [], []>} : vector<2x16xf32>, vector<16x32xf32>, vector<2x32xf32> -> vector<2x32xf32>
    %c0_3 = arith.constant 0 : index
    %c0_4 = arith.constant 0 : index
    %3 = vector.load %arg3[%c0_3, %c0_4] : memref<1x32xf32, #tpu.memory_space<vmem>>, vector<1x32xf32>
    %4 = vector.broadcast %3 : vector<1x32xf32> to vector<2x32xf32>
    %5 = arith.addf %2, %4 : vector<2x32xf32>
    %cst_5 = arith.constant 0.000000e+00 : f32
    %6 = vector.broadcast %cst_5 : f32 to vector<2x32xf32>
    %7 = arith.maximumf %5, %6 : vector<2x32xf32>
    %c0_6 = arith.constant 0 : index
    %c0_7 = arith.constant 0 : index
    %8 = vector.load %arg4[%c0_6, %c0_7] : memref<32x128xf32, #tpu.memory_space<vmem>>, vector<32x128xf32>
    %cst_8 = arith.constant dense<0.000000e+00> : vector<2x128xf32>
    %9 = tpu.matmul %7, %8, %cst_8 {dimension_numbers = #tpu.dot_dimension_numbers<[1], [0], [0], [1], [0, 0, 1, 1], [], []>} : vector<2x32xf32>, vector<32x128xf32>, vector<2x128xf32> -> vector<2x128xf32>
    %c0_9 = arith.constant 0 : index
    %c0_10 = arith.constant 0 : index
    %10 = vector.load %arg5[%c0_9, %c0_10] : memref<1x128xf32, #tpu.memory_space<vmem>>, vector<1x128xf32>
    %11 = vector.broadcast %10 : vector<1x128xf32> to vector<2x128xf32>
    %12 = arith.addf %9, %11 : vector<2x128xf32>
    %c0_11 = arith.constant 0 : index
    %c0_12 = arith.constant 0 : index
    %13 = vector.load %arg6[%c0_11, %c0_12] : memref<2x128xf32, #tpu.memory_space<vmem>>, vector<2x128xf32>
    tpu.vector_store %arg6[%c0_11, %c0_12], %12 {strides = array<i32>} : memref<2x128xf32, #tpu.memory_space<vmem>>, vector<2x128xf32>,
    return
  }
  func.func @transform_0(%arg0: i32) -> (i32, i32) {
    %c0_i32 = arith.constant 0 : i32
    %c0_i32_0 = arith.constant 0 : i32
    return %arg0, %c0_i32 : i32, i32
  }
  func.func @transform_1(%arg0: i32) -> (i32, i32) {
    %c0_i32 = arith.constant 0 : i32
    %c0_i32_0 = arith.constant 0 : i32
    %c0_i32_1 = arith.constant 0 : i32
    return %c0_i32, %c0_i32_0 : i32, i32
  }
  func.func @transform_2(%arg0: i32) -> (i32, i32) {
    %c0_i32 = arith.constant 0 : i32
    %c0_i32_0 = arith.constant 0 : i32
    %c0_i32_1 = arith.constant 0 : i32
    return %c0_i32, %c0_i32_0 : i32, i32
  }
  func.func @transform_3(%arg0: i32) -> (i32, i32) {
    %c0_i32 = arith.constant 0 : i32
    %c0_i32_0 = arith.constant 0 : i32
    %c0_i32_1 = arith.constant 0 : i32
    return %c0_i32, %c0_i32_0 : i32, i32
  }
  func.func @transform_4(%arg0: i32) -> (i32, i32) {
    %c0_i32 = arith.constant 0 : i32
    %c0_i32_0 = arith.constant 0 : i32
    %c0_i32_1 = arith.constant 0 : i32
    return %c0_i32, %c0_i32_0 : i32, i32
  }
  func.func @transform_5(%arg0: i32) -> (i32, i32) {
    %c0_i32 = arith.constant 0 : i32
    %c0_i32_0 = arith.constant 0 : i32
    return %arg0, %c0_i32 : i32, i32
  }
}

</mosaic_0001>

<llo_original>
// kernel: _forward_slab.1
$region0: #{_forward_slab.1}
  #allocation0 [shape = 'u32[]', space=smem, size = 0x4, offset = 0x4, fixed_abs, tag = 'smem constant byte address 0x4 - core index']
  #allocation1 [shape = 'u32[72,128]{1,0:T(1,128)}', space=vmem, size = 0x9000, scoped, tag = 'internal scratch']
  %s0 = inlined_call_operand.hbm [shape: f32[2,16], index: 0, kind: input, shape index: {}]
  %s1 = inlined_call_operand.hbm [shape: f32[16,32], index: 1, kind: input, shape index: {}]
  %s2 = inlined_call_operand.hbm [shape: f32[1,32], index: 2, kind: input, shape index: {}]
  %s3 = inlined_call_operand.hbm [shape: f32[32,128], index: 3, kind: input, shape index: {}]
  %s4 = inlined_call_operand.vmem [shape: f32[1,128], index: 4, kind: input, shape index: {}]
  %s5 = inlined_call_operand.hbm [shape: f32[2,128], index: 5, kind: output, shape index: {}]
  %s6 = sld [smem:[#allocation0]]
  $region46: #{_forward_slab.1} parent=0
    _
  %s8 = ssub.s32 1, %s6
  %s9 = scalar_select 0, %s8, %s6
  $region1: #{_forward_slab.1} parent=0
    #allocation2 [shape = 'u8[1024]{0}', space=vmem, size = 0x400, scoped, tag = 'input window, operand 0, single buffered']
    #allocation3 [shape = 's32[1]{0}', space=sflag, size = 0x4, scoped, tag = 'scoped memory for _forward_slab.1']
    #allocation4 [shape = 's32[1]{0}', space=sflag, size = 0x4, scoped, tag = 'scoped memory for _forward_slab.1']
    #allocation5 [shape = 'u8[8192]{0}', space=vmem, size = 0x2000, scoped, tag = 'input window, operand 1, single buffered']
    #allocation6 [shape = 's32[1]{0}', space=sflag, size = 0x4, scoped, tag = 'scoped memory for _forward_slab.1']
    #allocation7 [shape = 'u8[512]{0}', space=vmem, size = 0x400, scoped, tag = 'input window, operand 2, single buffered']
    #allocation8 [shape = 'u8[16384]{0}', space=vmem, size = 0x4000, scoped, tag = 'input window, operand 3, single buffered']
    #allocation9 [shape = 's32[1]{0}', space=sflag, size = 0x4, scoped, tag = 'scoped memory for _forward_slab.1']
    #allocation10 [shape = 'u8[1024]{0}', space=vmem, size = 0x400, scoped, tag = 'output window, operand 0, single buffered']
    %10 = vsyncpa [#allocation3], 0
    %11 = vsyncpa [#allocation6], 0
    %12 = vsyncpa [#allocation9], 0
    %13 = vsyncpa [#allocation4], 0
    // Predicated region
    $region2: #{_forward_slab.1} parent=1 // pred_check
      _
    $region3: #{_forward_slab.1} parent=1 // pred_check_branch
      %15 = sbr.rel (0) target = $region5
    $region4: #{_forward_slab.1} parent=1 // pred_region
      %17 = vsyncadd [#allocation3], 0
      %s19 = sshll.u32 %s0, 4
      %s20 = int_to_ptr.hbm [resolvable:$true] %s19
      %s21 = sshll.u32 [#allocation2], 4
      %s22 = int_to_ptr.vmem [resolvable:$true] %s21
      %24 = dma.hbm_to_vmem [thread:$0]  %s20, 32, %s22, [#allocation3]
    $region5: #{_forward_slab.1} parent=1 // pred_fallthru
      _
    // Predicated region
    $region6: #{_forward_slab.1} parent=1 // pred_check
      _
    $region7: #{_forward_slab.1} parent=1 // pred_check_branch
      %26 = sbr.rel (0) target = $region9
    $region8: #{_forward_slab.1} parent=1 // pred_region
      %28 = vsyncadd [#allocation6], 0
      %s29 = sshll.u32 %s1, 4
      %s30 = int_to_ptr.hbm [resolvable:$true] %s29
      %s31 = sshll.u32 [#allocation5], 4
      %s32 = int_to_ptr.vmem [resolvable:$true] %s31
      %37 = dma.hbm_to_vmem [thread:$0]  %s30, 256, %s32, [#allocation6], 128, 128, 8
    $region9: #{_forward_slab.1} parent=1 // pred_fallthru
      _
    // Predicated region
    $region10: #{_forward_slab.1} parent=1 // pred_check
      _
    $region11: #{_forward_slab.1} parent=1 // pred_check_branch
      %39 = sbr.rel (0) target = $region13
    $region12: #{_forward_slab.1} parent=1 // pred_region
      %41 = vsyncadd [#allocation6], 0
      %s43 = sshll.u32 %s2, 4
      %s44 = int_to_ptr.hbm [resolvable:$true] %s43
      %s45 = sshll.u32 [#allocation7], 4
      %s46 = int_to_ptr.vmem [resolvable:$true] %s45
      %48 = dma.hbm_to_vmem [thread:$0]  %s44, 16, %s46, [#allocation6]
    $region13: #{_forward_slab.1} parent=1 // pred_fallthru
      _
    // Predicated region
    $region14: #{_forward_slab.1} parent=1 // pred_check
      _
    $region15: #{_forward_slab.1} parent=1 // pred_check_branch
      %50 = sbr.rel (0) target = $region17
    $region16: #{_forward_slab.1} parent=1 // pred_region
      %52 = vsyncadd [#allocation9], 0
      %s53 = sshll.u32 %s3, 4
      %s54 = int_to_ptr.hbm [resolvable:$true] %s53
      %s55 = sshll.u32 [#allocation8], 4
      %s56 = int_to_ptr.vmem [resolvable:$true] %s55
      %61 = dma.hbm_to_vmem [thread:$0]  %s54, 512, %s56, [#allocation9], 128, 128, 8
    $region17: #{_forward_slab.1} parent=1 // pred_fallthru
      _
    // Predicated region
    $region18: #{_forward_slab.1} parent=1 // pred_check
      _
    $region19: #{_forward_slab.1} parent=1 // pred_check_branch
      %63 = sbr.rel (0) target = $region21
    $region20: #{_forward_slab.1} parent=1 // pred_region
      _
    $region21: #{_forward_slab.1} parent=1 // pred_fallthru
      _
    // Predicated region
    $region22: #{_forward_slab.1} parent=1 // pred_check
      _
    $region23: #{_forward_slab.1} parent=1 // pred_check_branch
      %65 = sbr.rel (0) target = $region25
    $region24: #{_forward_slab.1} parent=1 // pred_region
      %67 = dma.done [#allocation3], 32
    $region25: #{_forward_slab.1} parent=1 // pred_fallthru
      _
    // Predicated region
    $region26: #{_forward_slab.1} parent=1 // pred_check
      _
    $region27: #{_forward_slab.1} parent=1 // pred_check_branch
      %69 = sbr.rel (0) target = $region29
    $region28: #{_forward_slab.1} parent=1 // pred_region
      %71 = dma.done [#allocation6], 256
    $region29: #{_forward_slab.1} parent=1 // pred_fallthru
      _
    // Predicated region
    $region30: #{_forward_slab.1} parent=1 // pred_check
      _
    $region31: #{_forward_slab.1} parent=1 // pred_check_branch
      %73 = sbr.rel (0) target = $region33
    $region32: #{_forward_slab.1} parent=1 // pred_region
      %75 = dma.done [#allocation6], 16
    $region33: #{_forward_slab.1} parent=1 // pred_fallthru
      _
    // Predicated region
    $region34: #{_forward_slab.1} parent=1 // pred_check
      _
    $region35: #{_forward_slab.1} parent=1 // pred_check_branch
      %77 = sbr.rel (0) target = $region37
    $region36: #{_forward_slab.1} parent=1 // pred_region
      %79 = dma.done [#allocation9], 512
    $region37: #{_forward_slab.1} parent=1 // pred_fallthru
      _
    %v80 = vld [vmem:[#allocation2] sm:$0x3]
    %v81 = vld [vmem:[#allocation5] sm:$0xff]
    %v82 = vld [vmem:[#allocation5 + $0x8] sm:$0xff]
    %v83 = vld [vmem:[#allocation7] sm:$0x1]
    %v85 = vperm.slane %v83, 0
    %vm87 = vcmask 130048
    %v89 = vsel %vm87, %v80, 0
    %91 = vmatpush.msra.mxu0 0.0
    %92 = vmatpush.msra.mxu0 0.0
    %93 = vmatpush.msra.mxu0 0.0
    %94 = vmatpush.msra.mxu0 0.0
    %95 = vmatpush.msra.mxu0 0.0
    %96 = vmatpush.msra.mxu0 0.0
    %97 = vmatpush.msra.mxu0 0.0
    %98 = vmatpush.msra.mxu0 0.0
    %99 = vmatpush.msra.mxu0 0.0
    %100 = vmatpush.msra.mxu0 0.0
    %101 = vmatpush.msra.mxu0 0.0
    %102 = vmatpush.msra.mxu0 0.0
    %103 = vmatpush.msra.mxu0 0.0
    %104 = vmatpush.msra.mxu0 0.0
    %105 = vmatpush.msra.mxu0 %v82
    %106 = vmatpush.msra.mxu0 %v81
    %107 = vmatmul.f32.gmra.mxu0 %v89
    %v108 = vpop.f32.mrf.mxu0
    %v109 = vadd.f32 %v85, %v108
    %110 = vdwg.mxu0
    %v111 = vmax.f32 %v109, 0.0
    %v112 = vld [vmem:[#allocation8] sm:$0xff]
    %v113 = vld [vmem:[#allocation8 + $0x8] sm:$0xff]
    %v114 = vld [vmem:[#allocation8 + $0x10] sm:$0xff]
    %v115 = vld [vmem:[#allocation8 + $0x18] sm:$0xff]
    %v116 = vld [vmem:[%s4] sm:$0x1]
    %v118 = vperm.slane %v116, 0
    %vm120 = vcmask 261120
    %v122 = vsel %vm120, %v111, 0
    %124 = vmatpush.msra.mxu0 0.0
    %125 = vmatpush.msra.mxu0 0.0
    %126 = vmatpush.msra.mxu0 0.0
    %127 = vmatpush.msra.mxu0 0.0
    %128 = vmatpush.msra.mxu0 0.0
    %129 = vmatpush.msra.mxu0 0.0
    %130 = vmatpush.msra.mxu0 0.0
    %131 = vmatpush.msra.mxu0 0.0
    %132 = vmatpush.msra.mxu0 0.0
    %133 = vmatpush.msra.mxu0 0.0
    %134 = vmatpush.msra.mxu0 0.0
    %135 = vmatpush.msra.mxu0 0.0
    %136 = vmatpush.msra.mxu0 %v115
    %137 = vmatpush.msra.mxu0 %v114
    %138 = vmatpush.msra.mxu0 %v113
    %139 = vmatpush.msra.mxu0 %v112
    %140 = vmatmul.f32.gmra.mxu0 %v122
    %v141 = vpop.f32.mrf.mxu0
    %v142 = vadd.f32 %v118, %v141
    %143 = vdwg.mxu0
    %144 = vst [vmem:[#allocation10] sm:$0x3] %v142
    // Predicated region
    $region38: #{_forward_slab.1} parent=1 // pred_check
      _
    $region39: #{_forward_slab.1} parent=1 // pred_check_branch
      %146 = sbr.rel (0) target = $region41
    $region40: #{_forward_slab.1} parent=1 // pred_region
      %148 = vsyncadd [#allocation4], 0
      %s150 = sshll.u32 [#allocation10], 4
      %s151 = int_to_ptr.vmem [resolvable:$true] %s150
      %s152 = sshll.u32 %s5, 4
      %s153 = int_to_ptr.hbm [resolvable:$true] %s152
      %155 = dma.vmem_to_hbm [thread:$0]  %s151, 32, %s153, [#allocation4]
    $region41: #{_forward_slab.1} parent=1 // pred_fallthru
      _
    // Predicated region
    $region42: #{_forward_slab.1} parent=1 // pred_check
      _
    $region43: #{_forward_slab.1} parent=1 // pred_check_branch
      %157 = sbr.rel (0) target = $region45
    $region44: #{_forward_slab.1} parent=1 // pred_region
      %159 = dma.done [#allocation4], 32
    $region45: #{_forward_slab.1} parent=1 // pred_fallthru
      _
    %160 = vsyncpa [#allocation3], 1
    %161 = vsyncpa [#allocation6], 1
    %162 = vsyncpa [#allocation9], 1
    %163 = vsyncpa [#allocation4], 1

</llo_original>
